<compile_context>
chip_gen: v6e
topology: v6e:2x2x1
jax: 0.10.0
libtpu: 0.0.40
codegen_flags: <defaults>
</compile_context>

<pallas_src>
import functools

import jax
import jax.numpy as jnp
from jax import lax
from jax.experimental import pallas as pl
from jax.experimental.pallas import tpu as pltpu

_I32_MAX = 2**31 - 1


def _round_up(x, m):
    return ((x + m - 1) // m) * m


# -----------------------------------------------------------------------------
# Kernel A: fused RMSNorm + lm_head matmul + online greedy argmax per vocab
# slice.  grid = (nc, nk): nc vocab slices ("parallel" -> sharded across
# TensorCores on v7x), nk bf16 weight tiles per slice ("arbitrary", carries the
# online argmax).  No (B, V) tensor is ever resident in VMEM.
# -----------------------------------------------------------------------------
def _logits_argmax_kernel(hid_ref, wnorm_ref, wlm_ref, pmax_ref, pidx_ref,
                          hn_sc, max_sc, idx_sc, *, vocab_size, nv_total):
    B, _ = hid_ref.shape
    TV = wlm_ref.shape[1]
    c = pl.program_id(0)
    k = pl.program_id(1)
    nk = pl.num_programs(1)

    # Per-slice prologue: RMSNorm (hoisted, reused by every weight tile of the
    # slice) + online-argmax init.
    @pl.when(k == 0)
    def _():
        h = hid_ref[...].astype(jnp.float32)
        w = wnorm_ref[...].astype(jnp.float32)
        var = jnp.mean(h * h, axis=-1, keepdims=True)
        hn = h * lax.rsqrt(var + 1e-6) * w
        hn_sc[...] = hn.astype(jnp.bfloat16)
        max_sc[...] = jnp.full_like(max_sc, -jnp.inf)
        idx_sc[...] = jnp.zeros_like(idx_sc)

    # bf16 MXU matmul on this weight tile, f32 accumulation.
    logits = jnp.dot(hn_sc[...], wlm_ref[...],
                     preferred_element_type=jnp.float32)          # (B, TV)

    # The index_map clamps the block index on the ragged tail of the slice;
    # recompute it here so vidx matches the data actually fetched, and mask
    # the padded vocab tail (V not a multiple of TV) to -inf.
    blk = jnp.minimum(c * nk + k, nv_total - 1)
    vidx = lax.broadcasted_iota(jnp.int32, logits.shape, 1) + blk * TV
    logits = jnp.where(vidx < vocab_size, logits, -jnp.inf)

    # Online argmax with first-occurrence tie-breaking: min index within the
    # tile, strictly-greater update across tiles (duplicate clamped tiles are
    # therefore harmless).
    blk_max = jnp.max(logits, axis=-1, keepdims=True)
    blk_idx = jnp.min(jnp.where(logits == blk_max, vidx, _I32_MAX),
                      axis=-1, keepdims=True)
    better = blk_max > max_sc[...]
    idx_sc[...] = jnp.where(better, blk_idx, idx_sc[...])
    max_sc[...] = jnp.where(better, blk_max, max_sc[...])

    # Per-slice epilogue: publish the partial (max, idx), lane-replicated so
    # each slice writes a disjoint, contiguous >=512-byte HBM region.
    @pl.when(k == nk - 1)
    def _():
        pmax_ref[0] = jnp.broadcast_to(max_sc[...], (B, 128))
        pidx_ref[0] = jnp.broadcast_to(idx_sc[...], (B, 128))


# -----------------------------------------------------------------------------
# Kernel B (epilogue): combine per-slice partials into the sampled token with
# exact jnp.argmax tie-breaking, do the small in-place state updates, and
# stream token_count in (B, TVC) tiles adding the one-hot of the new token.
# grid = (cdiv(V, TVC),), "arbitrary" (the token scratch is carried).
# -----------------------------------------------------------------------------
def _postprocess_kernel(pmax_ref, pidx_ref, lti_ref, am_ref, gt_ref, gts_ref,
                        gi_ref, tc_ref,
                        tok_out, lti_out, am_out, gt_out, gts_out, gi_out,
                        tc_out, tok_sc):
    B = lti_ref.shape[0]
    S = am_ref.shape[1]
    SS = gts_ref.shape[1]
    TVC = tc_ref.shape[1]
    j = pl.program_id(0)

    @pl.when(j == 0)
    def _():
        # ---- cross-slice argmax reduce (tiny) ----
        pmax = pmax_ref[...]                  # (NC, B, 128), lane-replicated
        pidx = pidx_ref[...]
        gmax = jnp.max(pmax, axis=0)          # (B, 128)
        tok = jnp.min(jnp.where(pmax == gmax[None, :, :], pidx, _I32_MAX),
                      axis=0)                 # global first-occurrence argmax
        token = tok[:, 0:1]                   # (B, 1) i32
        tok_sc[...] = token
        tok_out[...] = token

        # TODO(synk): repetition_penalty path of the greedy SamplingModule not
        # implemented (repetition_penalty is None in this setup).

        # last_token_index = min(last_token_index + 1, S - 1)
        lti_new = jnp.minimum(lti_ref[...] + 1, S - 1)
        lti_out[...] = lti_new

        # attention_mask[b, last_token_index[b]] = 1
        sidx = lax.broadcasted_iota(jnp.int32, (B, S), 1)
        am_out[...] = jnp.where(sidx == lti_new, jnp.int32(1), am_ref[...])

        # generated_tokens[b, generated_index[b]] = token[b]  (+ streaming copy)
        gi = gi_ref[...]
        gt_out[...] = jnp.where(sidx == gi, token, gt_ref[...])
        ssidx = lax.broadcasted_iota(jnp.int32, (B, SS), 1)
        gts_out[...] = jnp.where(ssidx == gi, token, gts_ref[...])  # OOB -> dropped

        # generated_index = min(generated_index + 1, S - 1)
        gi_out[...] = jnp.minimum(gi + 1, S - 1)

    # ---- every step: token_count[b, token[b]] += 1 on this vocab tile ----
    token = tok_sc[...]
    vidx = lax.broadcasted_iota(jnp.int32, (B, TVC), 1) + j * TVC
    tc_out[...] = tc_ref[...] + (vidx == token).astype(tc_ref.dtype)


def postprocess_with_sampling(hidden, w_norm, w_lm_head, last_token_index,
                              attention_mask, generated_tokens,
                              generated_tokens_streaming, generated_index,
                              token_count, *, tv=None, tvc=None, nc=2):
    """hidden: (B, H) f32, w_lm_head: (H, V) bf16. Returns 7 updated tensors."""
    B, H = hidden.shape
    V = w_lm_head.shape[1]
    S = attention_mask.shape[1]
    SS = generated_tokens_streaming.shape[1]

    # ---- per-generation tile sizing (bf16 weight stream dominates) ----
    try:
        vmem_cap = int(getattr(pltpu.get_tpu_info(), "vmem_capacity_bytes",
                               64 * 1024 * 1024))
    except Exception:
        vmem_cap = 64 * 1024 * 1024
    if tv is None:
        # ~4-8 MiB per weight DMA so the ~0.35us/step overhead amortizes,
        # while 2x double-buffered tiles stay well inside VMEM (64 MiB v7x,
        # 128 MiB v5e/v6e).
        target = min(8 * 1024 * 1024, vmem_cap // 8)
        tv = max(256, (target // (H * 2)) // 256 * 256)
    tv = min(tv, _round_up(V, 128))
    nv_total = pl.cdiv(V, tv)          # weight tiles (ragged tail is masked)
    nc = max(1, min(nc, nv_total))     # vocab slices (v7x: one per TensorCore)
    nk = pl.cdiv(nv_total, nc)         # tiles per slice (clamped index_map)

    if tvc is None:
        tvc = 2048
    tvc = min(tvc, _round_up(V, 128))
    ntc = pl.cdiv(V, tvc)              # token_count tiles (streamed, kernel B)

    # ----------------------------- kernel A -----------------------------
    def const2(shape):
        return pl.BlockSpec(shape, lambda c, k, _n=len(shape): (0,) * _n)

    a_in_specs = [
        const2((B, H)),                                   # hidden (resident)
        const2((1, H)),                                   # norm weight (resident)
        pl.BlockSpec((H, tv),
                     lambda c, k, _nk=nk, _nv=nv_total:
                         (0, jnp.minimum(c * _nk + k, _nv - 1))),  # weight stream
    ]
    a_out_specs = (
        pl.BlockSpec((1, B, 128), lambda c, k: (c, 0, 0)),   # per-slice max
        pl.BlockSpec((1, B, 128), lambda c, k: (c, 0, 0)),   # per-slice argmax
    )
    a_out_shapes = (
        jax.ShapeDtypeStruct((nc, B, 128), jnp.float32),
        jax.ShapeDtypeStruct((nc, B, 128), jnp.int32),
    )
    a_scratch = [
        pltpu.VMEM((B, H), jnp.bfloat16),    # hoisted RMSNorm output
        pltpu.VMEM((B, 1), jnp.float32),     # running max
        pltpu.VMEM((B, 1), jnp.int32),       # running argmax index
    ]
    weight_tile_bytes = H * tv * 2
    a_vmem_need = (2 * weight_tile_bytes + 2 * B * H * 4 + 2 * H * 4
                   + B * H * 2 + 4 * nc * B * 128 * 4 + (1 << 20))
    a_vmem_limit = int(min(max(32 << 20, 2 * a_vmem_need), (3 * vmem_cap) // 4))
    a_cost = pl.CostEstimate(
        flops=2 * B * H * V,
        transcendentals=B * nc,
        bytes_accessed=H * V * 2 + B * H * 4 + H * 4 + 2 * nc * B * 128 * 4)

    pmax, pidx = pl.pallas_call(
        functools.partial(_logits_argmax_kernel, vocab_size=V,
                          nv_total=nv_total),
        out_shape=a_out_shapes,
        grid_spec=pltpu.PrefetchScalarGridSpec(
            num_scalar_prefetch=0,
            grid=(nc, nk),
            in_specs=a_in_specs,
            out_specs=a_out_specs,
            scratch_shapes=a_scratch),
        compiler_params=pltpu.CompilerParams(
            # Leading slice axis is independent -> shard across TensorCores
            # on v7x; the per-slice weight scan carries the online argmax.
            dimension_semantics=("parallel", "arbitrary"),
            vmem_limit_bytes=a_vmem_limit),
        cost_estimate=a_cost,
    )(hidden, w_norm, w_lm_head)
    # TODO(synk): int8 (v5e/v6e) / fp8 (v7x) quantized weight stream with
    # per-column scales would roughly halve the dominant HBM cost.

    # ----------------------------- kernel B -----------------------------
    def const1(shape):
        return pl.BlockSpec(shape, lambda j, _n=len(shape): (0,) * _n)

    b_in_specs = [
        const1((nc, B, 128)),                             # partial max
        const1((nc, B, 128)),                             # partial argmax
        const1((B, 1)),                                   # last_token_index
        const1((B, S)),                                   # attention_mask
        const1((B, S)),                                   # generated_tokens
        const1((B, SS)),                                  # generated_tokens_streaming
        const1((B, 1)),                                   # generated_index
        pl.BlockSpec((B, tvc), lambda j: (0, j)),         # token_count (streamed)
    ]
    b_out_specs = (
        const1((B, 1)),    # tokens
        const1((B, 1)),    # last_token_index
        const1((B, S)),    # attention_mask
        const1((B, S)),    # generated_tokens
        const1((B, SS)),   # generated_tokens_streaming
        const1((B, 1)),    # generated_index
        pl.BlockSpec((B, tvc), lambda j: (0, j)),         # token_count (streamed)
    )
    b_out_shapes = (
        jax.ShapeDtypeStruct((B, 1), jnp.int32),
        jax.ShapeDtypeStruct((B, 1), jnp.int32),
        jax.ShapeDtypeStruct((B, S), jnp.int32),
        jax.ShapeDtypeStruct((B, S), jnp.int32),
        jax.ShapeDtypeStruct((B, SS), jnp.int32),
        jax.ShapeDtypeStruct((B, 1), jnp.int32),
        jax.ShapeDtypeStruct((B, V), jnp.int32),
    )
    b_scratch = [pltpu.VMEM((B, 1), jnp.int32)]           # sampled token
    b_vmem_need = (4 * B * tvc * 4 + 4 * B * S * 4 + 2 * B * SS * 4
                   + 2 * nc * B * 128 * 8 + (1 << 20))
    b_vmem_limit = int(min(max(32 << 20, 2 * b_vmem_need), (3 * vmem_cap) // 4))
    b_cost = pl.CostEstimate(
        flops=2 * B * V,
        transcendentals=0,
        bytes_accessed=(2 * B * V * 4 + 4 * B * S * 4 + 2 * B * SS * 4
                        + 2 * nc * B * 128 * 8 + 8 * B * 4))

    return pl.pallas_call(
        _postprocess_kernel,
        out_shape=b_out_shapes,
        grid_spec=pltpu.PrefetchScalarGridSpec(
            num_scalar_prefetch=0,
            grid=(ntc,),
            in_specs=b_in_specs,
            out_specs=b_out_specs,
            scratch_shapes=b_scratch),
        # In-place state tensors: lti, am, gt, gts, gi, token_count.
        input_output_aliases={2: 1, 3: 2, 4: 3, 5: 4, 6: 5, 7: 6},
        compiler_params=pltpu.CompilerParams(
            dimension_semantics=("arbitrary",),   # token scratch carried over j
            vmem_limit_bytes=b_vmem_limit),
        cost_estimate=b_cost,
    )(pmax, pidx, last_token_index, attention_mask, generated_tokens,
      generated_tokens_streaming, generated_index, token_count)
    # TODO(synk): for very long decode buffers the one-element-per-row
    # attention_mask / generated_tokens scatters could move to XLA scatters
    # with buffer donation to avoid the full (B,S)/(B,SS) in+out DMAs.


def causal_model_with_sampling(params, input_ids, last_token_index,
                               attention_mask, generated_tokens,
                               generated_tokens_streaming, generated_index,
                               token_count, *, tv=None, tvc=None, nc=2):
    """Synthetic lm_model (embedding lookup -> last_hidden_states) followed by
    the fused norm + lm_head + greedy-sampling + postprocess Pallas kernels."""
    embed, w_norm, w_lm_head = params
    # lm_model glue: token_gen hidden states, shape (B, 1, H)
    last_hidden_states = embed[input_ids]                           # (B, 1, H)
    hidden = last_hidden_states.reshape(input_ids.shape[0], -1)     # (B, H)

    (tokens, lti, am, gt, gts, gi, tc) = postprocess_with_sampling(
        hidden, w_norm, w_lm_head, last_token_index, attention_mask,
        generated_tokens, generated_tokens_streaming, generated_index,
        token_count, tv=tv, tvc=tvc, nc=nc)

    return {
        'tokens': tokens,
        'last_token_index': lti,
        'attention_mask': am,
        'generated_tokens': gt,
        'generated_tokens_streaming': gts,
        'generated_index': gi,
        'token_count': tc,
        'last_hidden_states': last_hidden_states,
    }


def _reference(params, input_ids, last_token_index, attention_mask,
               generated_tokens, generated_tokens_streaming, generated_index,
               token_count):
    embed, w_norm, w_lm_head = params
    B = input_ids.shape[0]
    S = attention_mask.shape[1]
    h = embed[input_ids].reshape(B, -1).astype(jnp.float32)
    hn = h * lax.rsqrt(jnp.mean(h * h, -1, keepdims=True) + 1e-6) * w_norm
    logits = jnp.dot(hn.astype(jnp.bfloat16), w_lm_head,
                     preferred_element_type=jnp.float32)
    tokens = jnp.argmax(logits, axis=-1).astype(jnp.int32)[:, None]
    lti = jnp.minimum(last_token_index + 1, S - 1)
    am = attention_mask.at[jnp.arange(B), lti[:, 0]].set(1)
    gt = generated_tokens.at[jnp.arange(B), generated_index[:, 0]].set(tokens[:, 0])
    gts = generated_tokens_streaming.at[jnp.arange(B),
                                        generated_index[:, 0]].set(tokens[:, 0])
    gi = jnp.minimum(generated_index + 1, S - 1)
    tc = token_count.at[jnp.arange(B), tokens[:, 0]].add(1)
    return tokens, lti, am, gt, gts, gi, tc


if __name__ == "__main__":
    # batch, hidden, vocab, max_seq_len, streaming.  V=640 with tv=128 / nc=2
    # exercises the sliced vocab scan (5 tiles -> slices of 3+2 with one
    # clamped duplicate tile) and the 5-tile token_count stream.
    B, H, V, S, SS = 2, 128, 640, 64, 16

    key = jax.random.PRNGKey(0)
    k_emb, k_norm, k_lm, k_ids = jax.random.split(key, 4)
    embed = 0.02 * jax.random.normal(k_emb, (V, H), jnp.float32)
    w_norm = 1.0 + 0.1 * jax.random.normal(k_norm, (1, H), jnp.float32)
    w_lm_head = (0.05 * jax.random.normal(k_lm, (H, V), jnp.float32)
                 ).astype(jnp.bfloat16)          # bf16 weight streamed by the kernel
    params = (embed, w_norm, w_lm_head)

    input_ids = jax.random.randint(k_ids, (B, 1), 0, V, jnp.int32)
    last_token_index = jnp.array([[3], [6]], jnp.int32)
    attention_mask = (jnp.arange(S)[None, :] <= last_token_index).astype(jnp.int32)
    generated_tokens = jnp.zeros((B, S), jnp.int32)
    generated_tokens_streaming = jnp.zeros((B, SS), jnp.int32)
    generated_index = jnp.array([[0], [2]], jnp.int32)
    token_count = jnp.zeros((B, V), jnp.int32)

    out = causal_model_with_sampling(params, input_ids, last_token_index,
                                     attention_mask, generated_tokens,
                                     generated_tokens_streaming,
                                     generated_index, token_count,
                                     tv=128, tvc=128, nc=2)
    jax.block_until_ready(out)

    ref = _reference(params, input_ids, last_token_index, attention_mask,
                     generated_tokens, generated_tokens_streaming,
                     generated_index, token_count)
    names = ('tokens', 'last_token_index', 'attention_mask', 'generated_tokens',
             'generated_tokens_streaming', 'generated_index', 'token_count')
    for name, r in zip(names, ref):
        assert jnp.array_equal(out[name], r), f"mismatch in {name}"

    print("KERNEL_OK")
</pallas_src>

<mosaic_0001>
module attributes {stable_mosaic.version = 11 : i64} {
  func.func @_logits_argmax_kernel(%arg0: i32, %arg1: i32, %arg2: memref<2x128xf32, #tpu.memory_space<vmem>>, %arg3: memref<1x128xf32, #tpu.memory_space<vmem>>, %arg4: memref<128x128xbf16, #tpu.memory_space<vmem>>, %arg5: memref<1x2x128xf32, #tpu.memory_space<vmem>>, %arg6: memref<1x2x128xi32, #tpu.memory_space<vmem>>, %arg7: memref<2x128xbf16, #tpu.memory_space<vmem>>, %arg8: memref<2x1xf32, #tpu.memory_space<vmem>>, %arg9: memref<2x1xi32, #tpu.memory_space<vmem>>) attributes {dimension_semantics = [#tpu.dimension_semantics<parallel>, #tpu.dimension_semantics<arbitrary>], iteration_bounds = array<i64: 2, 3>, scalar_prefetch = 0 : i64, scratch_operands = 3 : i64, tpu.core_type = #tpu.core_type<tc>, window_params = [{pipeline_mode = #tpu.pipeline_mode<synchronous>, transform_indices = @transform_0, window_bounds = array<i64: 2, 128>}, {pipeline_mode = #tpu.pipeline_mode<synchronous>, transform_indices = @transform_1, window_bounds = array<i64: 1, 128>}, {transform_indices = @transform_2, window_bounds = array<i64: 128, 128>}, {transform_indices = @transform_3, window_bounds = array<i64: 1, 2, 128>}, {transform_indices = @transform_4, window_bounds = array<i64: 1, 2, 128>}]} {
    %c0_i32 = arith.constant 0 : i32
    %0 = arith.cmpi eq, %arg1, %c0_i32 : i32
    %1 = arith.extui %0 : i1 to i32
    %c0_i32_0 = arith.constant 0 : i32
    %2 = arith.cmpi ne, %1, %c0_i32_0 : i32
    scf.if %2 {
      %c0_18 = arith.constant 0 : index
      %c0_19 = arith.constant 0 : index
      %36 = vector.load %arg2[%c0_18, %c0_19] : memref<2x128xf32, #tpu.memory_space<vmem>>, vector<2x128xf32>
      %c0_20 = arith.constant 0 : index
      %c0_21 = arith.constant 0 : index
      %37 = vector.load %arg3[%c0_20, %c0_21] : memref<1x128xf32, #tpu.memory_space<vmem>>, vector<1x128xf32>
      %38 = arith.mulf %36, %36 : vector<2x128xf32>
      %cst_22 = arith.constant dense<0.000000e+00> : vector<2xf32>
      %39 = vector.multi_reduction <add>, %38, %cst_22 [1] : vector<2x128xf32> to vector<2xf32>
      %40 = vector.shape_cast %39 : vector<2xf32> to vector<2x1xf32>
      %cst_23 = arith.constant 1.280000e+02 : f32
      %41 = vector.broadcast %cst_23 : f32 to vector<2x1xf32>
      %42 = arith.divf %40, %41 : vector<2x1xf32>
      %cst_24 = arith.constant 9.99999997E-7 : f32
      %43 = vector.broadcast %cst_24 : f32 to vector<2x1xf32>
      %44 = arith.addf %42, %43 : vector<2x1xf32>
      %45 = math.rsqrt %44 : vector<2x1xf32>
      %46 = vector.broadcast %45 : vector<2x1xf32> to vector<2x128xf32>
      %47 = arith.mulf %36, %46 : vector<2x128xf32>
      %48 = vector.broadcast %37 : vector<1x128xf32> to vector<2x128xf32>
      %49 = arith.mulf %47, %48 : vector<2x128xf32>
      %50 = arith.truncf %49 : vector<2x128xf32> to vector<2x128xbf16>
      %c0_25 = arith.constant 0 : index
      %c0_26 = arith.constant 0 : index
      %51 = vector.load %arg7[%c0_25, %c0_26] : memref<2x128xbf16, #tpu.memory_space<vmem>>, vector<2x128xbf16>
      tpu.vector_store %arg7[%c0_25, %c0_26], %50 {strides = array<i32>} : memref<2x128xbf16, #tpu.memory_space<vmem>>, vector<2x128xbf16>,
      %cst_27 = arith.constant 0xFF800000 : f32
      %52 = vector.broadcast %cst_27 : f32 to vector<2x1xf32>
      %c0_28 = arith.constant 0 : index
      %c0_29 = arith.constant 0 : index
      %53 = vector.load %arg8[%c0_28, %c0_29] : memref<2x1xf32, #tpu.memory_space<vmem>>, vector<2x1xf32>
      tpu.vector_store %arg8[%c0_28, %c0_29], %52 {strides = array<i32>} : memref<2x1xf32, #tpu.memory_space<vmem>>, vector<2x1xf32>,
      %c0_i32_30 = arith.constant 0 : i32
      %54 = vector.broadcast %c0_i32_30 : i32 to vector<2x1xi32>
      %c0_31 = arith.constant 0 : index
      %c0_32 = arith.constant 0 : index
      %55 = vector.load %arg9[%c0_31, %c0_32] : memref<2x1xi32, #tpu.memory_space<vmem>>, vector<2x1xi32>
      tpu.vector_store %arg9[%c0_31, %c0_32], %54 {strides = array<i32>} : memref<2x1xi32, #tpu.memory_space<vmem>>, vector<2x1xi32>,
    } else {
    }
    %c0 = arith.constant 0 : index
    %c0_1 = arith.constant 0 : index
    %3 = vector.load %arg7[%c0, %c0_1] : memref<2x128xbf16, #tpu.memory_space<vmem>>, vector<2x128xbf16>
    %c0_2 = arith.constant 0 : index
    %c0_3 = arith.constant 0 : index
    %4 = vector.load %arg4[%c0_2, %c0_3] : memref<128x128xbf16, #tpu.memory_space<vmem>>, vector<128x128xbf16>
    %cst = arith.constant dense<0.000000e+00> : vector<2x128xf32>
    %5 = tpu.matmul %3, %4, %cst {dimension_numbers = #tpu.dot_dimension_numbers<[1], [0], [0], [1], [0, 0, 1, 1], [], []>} : vector<2x128xbf16>, vector<128x128xbf16>, vector<2x128xf32> -> vector<2x128xf32>
    %c3_i32 = arith.constant 3 : i32
    %6 = arith.muli %arg0, %c3_i32 : i32
    %7 = arith.addi %6, %arg1 : i32
    %c4_i32 = arith.constant 4 : i32
    %8 = arith.minsi %7, %c4_i32 : i32
    %9 = tpu.iota {dimensions = array<i32: 1>} : vector<2x128xi32>
    %c128_i32 = arith.constant 128 : i32
    %10 = arith.muli %8, %c128_i32 : i32
    %11 = vector.broadcast %10 : i32 to vector<2x128xi32>
    %12 = arith.addi %9, %11 : vector<2x128xi32>
    %c640_i32 = arith.constant 640 : i32
    %13 = vector.broadcast %c640_i32 : i32 to vector<2x128xi32>
    %14 = arith.cmpi slt, %12, %13 : vector<2x128xi32>
    %cst_4 = arith.constant 0xFF800000 : f32
    %15 = vector.broadcast %cst_4 : f32 to vector<2x128xf32>
    %16 = arith.select %14, %5, %15 : vector<2x128xi1>, vector<2x128xf32>
    %cst_5 = arith.constant dense<0xFF800000> : vector<2xf32>
    %17 = vector.multi_reduction <maximumf>, %16, %cst_5 [1] : vector<2x128xf32> to vector<2xf32>
    %18 = vector.shape_cast %17 : vector<2xf32> to vector<2x1xf32>
    %19 = vector.broadcast %18 : vector<2x1xf32> to vector<2x128xf32>
    %20 = arith.cmpf oeq, %16, %19 : vector<2x128xf32>
    %c2147483647_i32 = arith.constant 2147483647 : i32
    %21 = vector.broadcast %c2147483647_i32 : i32 to vector<2x128xi32>
    %22 = arith.select %20, %12, %21 : vector<2x128xi1>, vector<2x128xi32>
    %cst_6 = arith.constant dense<2147483647> : vector<2xi32>
    %23 = vector.multi_reduction <minsi>, %22, %cst_6 [1] : vector<2x128xi32> to vector<2xi32>
    %24 = vector.shape_cast %23 : vector<2xi32> to vector<2x1xi32>
    %c0_7 = arith.constant 0 : index
    %c0_8 = arith.constant 0 : index
    %25 = vector.load %arg8[%c0_7, %c0_8] : memref<2x1xf32, #tpu.memory_space<vmem>>, vector<2x1xf32>
    %26 = arith.cmpf ogt, %18, %25 : vector<2x1xf32>
    %c0_9 = arith.constant 0 : index
    %c0_10 = arith.constant 0 : index
    %27 = vector.load %arg9[%c0_9, %c0_10] : memref<2x1xi32, #tpu.memory_space<vmem>>, vector<2x1xi32>
    %28 = arith.select %26, %24, %27 : vector<2x1xi1>, vector<2x1xi32>
    %c0_11 = arith.constant 0 : index
    %c0_12 = arith.constant 0 : index
    %29 = vector.load %arg9[%c0_11, %c0_12] : memref<2x1xi32, #tpu.memory_space<vmem>>, vector<2x1xi32>
    tpu.vector_store %arg9[%c0_11, %c0_12], %28 {strides = array<i32>} : memref<2x1xi32, #tpu.memory_space<vmem>>, vector<2x1xi32>,
    %c0_13 = arith.constant 0 : index
    %c0_14 = arith.constant 0 : index
    %30 = vector.load %arg8[%c0_13, %c0_14] : memref<2x1xf32, #tpu.memory_space<vmem>>, vector<2x1xf32>
    %31 = arith.select %26, %18, %30 : vector<2x1xi1>, vector<2x1xf32>
    %c0_15 = arith.constant 0 : index
    %c0_16 = arith.constant 0 : index
    %32 = vector.load %arg8[%c0_15, %c0_16] : memref<2x1xf32, #tpu.memory_space<vmem>>, vector<2x1xf32>
    tpu.vector_store %arg8[%c0_15, %c0_16], %31 {strides = array<i32>} : memref<2x1xf32, #tpu.memory_space<vmem>>, vector<2x1xf32>,
    %c2_i32 = arith.constant 2 : i32
    %33 = arith.cmpi eq, %arg1, %c2_i32 : i32
    %34 = arith.extui %33 : i1 to i32
    %c0_i32_17 = arith.constant 0 : i32
    %35 = arith.cmpi ne, %34, %c0_i32_17 : i32
    scf.if %35 {
      %c0_18 = arith.constant 0 : index
      %c0_19 = arith.constant 0 : index
      %36 = vector.load %arg8[%c0_18, %c0_19] : memref<2x1xf32, #tpu.memory_space<vmem>>, vector<2x1xf32>
      %37 = vector.shape_cast %36 : vector<2x1xf32> to vector<2x1xf32>
      %38 = vector.broadcast %37 : vector<2x1xf32> to vector<2x128xf32>
      %c0_20 = arith.constant 0 : index
      %c0_21 = arith.constant 0 : index
      %c0_22 = arith.constant 0 : index
      %39 = vector.load %arg5[%c0_20, %c0_21, %c0_22] : memref<1x2x128xf32, #tpu.memory_space<vmem>>, vector<1x2x128xf32>
      %40 = vector.shape_cast %39 : vector<1x2x128xf32> to vector<2x128xf32>
      %41 = vector.shape_cast %38 : vector<2x128xf32> to vector<1x2x128xf32>
      tpu.vector_store %arg5[%c0_20, %c0_21, %c0_22], %41 {strides = array<i32>} : memref<1x2x128xf32, #tpu.memory_space<vmem>>, vector<1x2x128xf32>,
      %c0_23 = arith.constant 0 : index
      %c0_24 = arith.constant 0 : index
      %42 = vector.load %arg9[%c0_23, %c0_24] : memref<2x1xi32, #tpu.memory_space<vmem>>, vector<2x1xi32>
      %43 = vector.shape_cast %42 : vector<2x1xi32> to vector<2x1xi32>
      %44 = vector.broadcast %43 : vector<2x1xi32> to vector<2x128xi32>
      %c0_25 = arith.constant 0 : index
      %c0_26 = arith.constant 0 : index
      %c0_27 = arith.constant 0 : index
      %45 = vector.load %arg6[%c0_25, %c0_26, %c0_27] : memref<1x2x128xi32, #tpu.memory_space<vmem>>, vector<1x2x128xi32>
      %46 = vector.shape_cast %45 : vector<1x2x128xi32> to vector<2x128xi32>
      %47 = vector.shape_cast %44 : vector<2x128xi32> to vector<1x2x128xi32>
      tpu.vector_store %arg6[%c0_25, %c0_26, %c0_27], %47 {strides = array<i32>} : memref<1x2x128xi32, #tpu.memory_space<vmem>>, vector<1x2x128xi32>,
    } else {
    }
    return
  }
  func.func @transform_0(%arg0: i32, %arg1: i32) -> (i32, i32) {
    %c0_i32 = arith.constant 0 : i32
    %c0_i32_0 = arith.constant 0 : i32
    %c0_i32_1 = arith.constant 0 : i32
    return %c0_i32, %c0_i32_0 : i32, i32
  }
  func.func @transform_1(%arg0: i32, %arg1: i32) -> (i32, i32) {
    %c0_i32 = arith.constant 0 : i32
    %c0_i32_0 = arith.constant 0 : i32
    %c0_i32_1 = arith.constant 0 : i32
    return %c0_i32, %c0_i32_0 : i32, i32
  }
  func.func @transform_2(%arg0: i32, %arg1: i32) -> (i32, i32) {
    %c3_i32 = arith.constant 3 : i32
    %0 = arith.muli %arg0, %c3_i32 : i32
    %1 = arith.addi %0, %arg1 : i32
    %c4_i32 = arith.constant 4 : i32
    %2 = arith.minsi %1, %c4_i32 : i32
    %c0_i32 = arith.constant 0 : i32
    %c0_i32_0 = arith.constant 0 : i32
    return %c0_i32, %2 : i32, i32
  }
  func.func @transform_3(%arg0: i32, %arg1: i32) -> (i32, i32, i32) {
    %c0_i32 = arith.constant 0 : i32
    %c0_i32_0 = arith.constant 0 : i32
    %c0_i32_1 = arith.constant 0 : i32
    return %arg0, %c0_i32, %c0_i32_0 : i32, i32, i32
  }
  func.func @transform_4(%arg0: i32, %arg1: i32) -> (i32, i32, i32) {
    %c0_i32 = arith.constant 0 : i32
    %c0_i32_0 = arith.constant 0 : i32
    %c0_i32_1 = arith.constant 0 : i32
    return %arg0, %c0_i32, %c0_i32_0 : i32, i32, i32
  }
}

</mosaic_0001>

<llo_original>
// kernel: tpu_custom_call.1
$region0: #{tpu_custom_call.1}
  #allocation0 [shape = 'u32[]', space=smem, size = 0x4, offset = 0x4, fixed_abs, tag = 'smem constant byte address 0x4 - core index']
  #allocation1 [shape = 'u32[144,128]{1,0:T(1,128)}', space=vmem, size = 0x12000, scoped, tag = 'internal scratch']
  #allocation2 [shape = 'bf16[2,128]{1,0:T(2,128)(2,1)}', space=vmem, size = 0x200, scoped, tag = 'scratch operand']
  #allocation3 [shape = 'f32[2,1]{1,0:T(2,128)}', space=vmem, size = 0x400, scoped, tag = 'scratch operand']
  #allocation4 [shape = 's32[2,1]{1,0:T(2,128)}', space=vmem, size = 0x400, scoped, tag = 'scratch operand']
  %s0 = inlined_call_operand.hbm [shape: f32[2,128], index: 0, kind: input, shape index: {}]
  %s1 = inlined_call_operand.vmem [shape: f32[1,128], index: 1, kind: input, shape index: {}]
  %s2 = inlined_call_operand.hbm [shape: bf16[128,640], index: 2, kind: input, shape index: {}]
  %s3 = inlined_call_operand.hbm [shape: f32[2,2,128], index: 3, kind: output, shape index: {0}]
  %s4 = inlined_call_operand.hbm [shape: s32[2,2,128], index: 4, kind: output, shape index: {1}]
  %5 = xla_tuple %s3, %s4
  %s6 = sld [smem:[#allocation0]]
  $region69: #{tpu_custom_call.1} parent=0
    _
  %s8 = ssub.s32 1, %s6
  %s9 = scalar_select 0, %s8, %s6
  $region1: #{tpu_custom_call.1} parent=0
    #allocation5 [shape = 'u8[1024]{0}', space=vmem, size = 0x400, scoped, tag = 'input window, operand 0, single buffered']
    #allocation6 [shape = 's32[2]{0}', space=sflag, size = 0x8, scoped, tag = 'scoped memory for tpu_custom_call.1']
    #allocation7 [shape = 's32[2]{0}', space=sflag, size = 0x8, scoped, tag = 'scoped memory for tpu_custom_call.1']
    #allocation8 [shape = 'u8[65536]{0}', space=vmem, size = 0x10000, scoped, tag = 'input window, operand 2']
    #allocation9 [shape = 's32[2]{0}', space=sflag, size = 0x8, scoped, tag = 'scoped memory for tpu_custom_call.1']
    #allocation10 [shape = 'u8[2048]{0}', space=vmem, size = 0x800, scoped, tag = 'output window, operand 0']
    #allocation11 [shape = 'u8[2048]{0}', space=vmem, size = 0x800, scoped, tag = 'output window, operand 1']
    #allocation12 [shape = 's32[2]{0}', space=sflag, size = 0x8, scoped, tag = 'scoped memory for tpu_custom_call.1']
    %10 = vsyncpa [#allocation6], 0
    %11 = vsyncpa [#allocation9], 0
    %s12 = scalar_lea.sflag [#allocation9], 1
    %13 = vsyncpa %s12, 0
    %14 = vsyncpa [#allocation7], 0
    %s15 = scalar_lea.sflag [#allocation7], 1
    %16 = vsyncpa %s15, 0
    %17 = vsyncpa [#allocation12], 0
    %s18 = scalar_lea.sflag [#allocation12], 1
    %19 = vsyncpa %s18, 0
    loop: start=0, step=1, limit=8
    $region2: #{tpu_custom_call.1} parent=1 // loop_pre_header
      _
    $region3: #{tpu_custom_call.1} parent=1 // loop_header
      %s21 = sphi 0, %s25
      %p22 = scmp.ge.s32.totalorder %s21, 8
      %s28 = sphi 0, %s40
      %s29 = sphi 0, %s36
      %s30 = sphi 0, %s28
      %s31 = sphi 0, %s29
      %s32 = sphi 0, %s30
      %s33 = sphi 0, %s31
      %s41 = sphi 0, %s41
      %s43 = sphi 0, %s41
      %s44 = sphi 0, %s43
      %s58 = sphi 0, %s44
      %s62 = sphi 0, %s62
      %s64 = sphi 0, %s62
      %s65 = sphi 0, %s64
      %s79 = sphi 0, %s65
      %s93 = sphi 0, %s95
      %s96 = sphi 0, %s93
      %s97 = sphi 0, %s96
      %s113 = sphi 0, %s97
      %s119 = sphi 0, %s121
      %s122 = sphi 0, %s119
      %s123 = sphi 0, %s122
      %s139 = sphi 0, %s123
      %s145 = sphi 0, %s147
      %s148 = sphi 0, %s145
      %s149 = sphi 0, %s148
      %s165 = sphi 0, %s149
    $region4: #{tpu_custom_call.1} parent=1 // loop_header_branch
      %24 = sbr.rel (%p22) target = $region8
    $region5: #{tpu_custom_call.1} parent=1 // loop_body
      %s26 = ssub.s32 %s21, 1
      %s27 = ssub.s32 %s21, 2
      %s34 = sadd.s32 1, %s29
      %p35 = scmp.ge.s32.totalorder %s34, 3
      %s36 = scalar_select %p35, 0, %s34
      %s37 = sadd.s32 1, %s28
      %s38 = scalar_select %p35, %s37, %s28
      %p39 = scmp.ge.s32.totalorder %s38, 2
      %s40 = scalar_select %p39, 0, %s38
      %s42 = sadd.s32 %s41, 1
      %p45 = scmp.eq.s32.totalorder %s21, 5
      %p46 = scmp.ne.s32.totalorder %s41, %s43
      %p47 = scmp.eq.s32.totalorder %s21, 0
      %p48 = por %p46, %p47
      %p49 = scmp.ne.s32.totalorder %s41, %s43
      %p50 = scmp.eq.s32.totalorder %s26, 5
      %p51 = por %p49, %p50
      %p52 = scmp.ne.s32.totalorder %s43, %s44
      %p53 = scmp.eq.s32.totalorder %s26, 0
      %p54 = por %p52, %p53
      %p55 = scmp.ne.s32.totalorder %s43, %s44
      %p56 = scmp.eq.s32.totalorder %s27, 5
      %p57 = por %p55, %p56
      %p59 = scmp.ne.s32.totalorder %s44, %s58
      %p60 = scmp.eq.s32.totalorder %s27, 0
      %p61 = por %p59, %p60
      %s63 = sadd.s32 %s62, 1
      %p66 = scmp.eq.s32.totalorder %s21, 5
      %p67 = scmp.ne.s32.totalorder %s62, %s64
      %p68 = scmp.eq.s32.totalorder %s21, 0
      %p69 = por %p67, %p68
      %p70 = scmp.ne.s32.totalorder %s62, %s64
      %p71 = scmp.eq.s32.totalorder %s26, 5
      %p72 = por %p70, %p71
      %p73 = scmp.ne.s32.totalorder %s64, %s65
      %p74 = scmp.eq.s32.totalorder %s26, 0
      %p75 = por %p73, %p74
      %p76 = scmp.ne.s32.totalorder %s64, %s65
      %p77 = scmp.eq.s32.totalorder %s27, 5
      %p78 = por %p76, %p77
      %p80 = scmp.ne.s32.totalorder %s65, %s79
      %p81 = scmp.eq.s32.totalorder %s27, 0
      %p82 = por %p80, %p81
      %s83 = smul.u32 %s28, 3
      %s84 = sadd.s32 %s83, %s29
      %p85 = scmp.lt.s32.totalorder %s84, 4
      %s86 = scalar_select %p85, %s84, 4
      %s87 = smul.u32 %s40, 3
      %s88 = sadd.s32 %s87, %s36
      %p89 = scmp.lt.s32.totalorder %s88, 4
      %s90 = scalar_select %p89, %s88, 4
      %s91 = ssub.s32 %s86, %s90
      %p92 = scmp.eq.s32.totalorder %s91, 0
      %s94 = sadd.s32 %s93, 1
      %s95 = scalar_select %p92, %s93, %s94
      %p98 = pneg %p92
      %p99 = scmp.eq.s32.totalorder %s21, 5
      %p100 = por %p98, %p99
      %p101 = scmp.ne.s32.totalorder %s93, %s96
      %p102 = scmp.eq.s32.totalorder %s21, 0
      %p103 = por %p101, %p102
      %p104 = scmp.ne.s32.totalorder %s93, %s96
      %p105 = scmp.eq.s32.totalorder %s26, 5
      %p106 = por %p104, %p105
      %p107 = scmp.ne.s32.totalorder %s96, %s97
      %p108 = scmp.eq.s32.totalorder %s26, 0
      %p109 = por %p107, %p108
      %p110 = scmp.ne.s32.totalorder %s96, %s97
      %p111 = scmp.eq.s32.totalorder %s27, 5
      %p112 = por %p110, %p111
      %p114 = scmp.ne.s32.totalorder %s97, %s113
      %p115 = scmp.eq.s32.totalorder %s27, 0
      %p116 = por %p114, %p115
      %s117 = ssub.s32 %s28, %s40
      %p118 = scmp.eq.s32.totalorder %s117, 0
      %s120 = sadd.s32 %s119, 1
      %s121 = scalar_select %p118, %s119, %s120
      %p124 = pneg %p118
      %p125 = scmp.eq.s32.totalorder %s21, 5
      %p126 = por %p124, %p125
      %p127 = scmp.ne.s32.totalorder %s119, %s122
      %p128 = scmp.eq.s32.totalorder %s21, 0
      %p129 = por %p127, %p128
      %p130 = scmp.ne.s32.totalorder %s119, %s122
      %p131 = scmp.eq.s32.totalorder %s26, 5
      %p132 = por %p130, %p131
      %p133 = scmp.ne.s32.totalorder %s122, %s123
      %p134 = scmp.eq.s32.totalorder %s26, 0
      %p135 = por %p133, %p134
      %p136 = scmp.ne.s32.totalorder %s122, %s123
      %p137 = scmp.eq.s32.totalorder %s27, 5
      %p138 = por %p136, %p137
      %p140 = scmp.ne.s32.totalorder %s123, %s139
      %p141 = scmp.eq.s32.totalorder %s27, 0
      %p142 = por %p140, %p141
      %s143 = ssub.s32 %s28, %s40
      %p144 = scmp.eq.s32.totalorder %s143, 0
      %s146 = sadd.s32 %s145, 1
      %s147 = scalar_select %p144, %s145, %s146
      %p150 = pneg %p144
      %p151 = scmp.eq.s32.totalorder %s21, 5
      %p152 = por %p150, %p151
      %p153 = scmp.ne.s32.totalorder %s145, %s148
      %p154 = scmp.eq.s32.totalorder %s21, 0
      %p155 = por %p153, %p154
      %p156 = scmp.ne.s32.totalorder %s145, %s148
      %p157 = scmp.eq.s32.totalorder %s26, 5
      %p158 = por %p156, %p157
      %p159 = scmp.ne.s32.totalorder %s148, %s149
      %p160 = scmp.eq.s32.totalorder %s26, 0
      %p161 = por %p159, %p160
      %p162 = scmp.ne.s32.totalorder %s148, %s149
      %p163 = scmp.eq.s32.totalorder %s27, 5
      %p164 = por %p162, %p163
      %p166 = scmp.ne.s32.totalorder %s149, %s165
      %p167 = scmp.eq.s32.totalorder %s27, 0
      %p168 = por %p166, %p167
      %p169 = scmp.le.s32.totalorder 1, %s21
      %p170 = scmp.lt.s32.totalorder %s21, 7
      %p171 = pnand %p169, %p170
      %p172 = pneg %p171
      // Predicated region
      $region9: #{tpu_custom_call.1} parent=5 // pred_check
        _
      $region10: #{tpu_custom_call.1} parent=5 // pred_check_branch
        %174 = sbr.rel (%p171) target = $region12
      $region11: #{tpu_custom_call.1} parent=5 // pred_region
        %s175 = ssub.s32 %s21, 1
        // Predicated region
        $region13: #{tpu_custom_call.1} parent=11 // pred_check
          %p176 = pneg %p54
        $region14: #{tpu_custom_call.1} parent=11 // pred_check_branch
          %178 = sbr.rel (%p176) target = $region16
        $region15: #{tpu_custom_call.1} parent=11 // pred_region
          %s180 = ssub.s32 32, 32
          %181 = vsyncadd [#allocation6], %s180
          %s183 = sshll.u32 [#allocation5], 4
          %s184 = int_to_ptr.vmem [resolvable:$true] %s183
          %186 = dma.hbm_to_vmem [thread:$0]  %s0, 32, %s184, [#allocation6]
        $region16: #{tpu_custom_call.1} parent=11 // pred_fallthru
          _
        // Predicated region
        $region17: #{tpu_custom_call.1} parent=11 // pred_check
          %p187 = pneg %p75
        $region18: #{tpu_custom_call.1} parent=11 // pred_check_branch
          %189 = sbr.rel (%p187) target = $region20
        $region19: #{tpu_custom_call.1} parent=11 // pred_region
          _
        $region20: #{tpu_custom_call.1} parent=11 // pred_fallthru
          _
      $region12: #{tpu_custom_call.1} parent=5 // pred_fallthru
        _
      %p190 = scmp.lt.s32.totalorder %s21, 6
      // Predicated region
      $region21: #{tpu_custom_call.1} parent=5 // pred_check
        %p191 = pneg %p190
      $region22: #{tpu_custom_call.1} parent=5 // pred_check_branch
        %193 = sbr.rel (%p191) target = $region24
      $region23: #{tpu_custom_call.1} parent=5 // pred_region
        // Predicated region
        $region25: #{tpu_custom_call.1} parent=23 // pred_check
          %p194 = pneg %p103
        $region26: #{tpu_custom_call.1} parent=23 // pred_check_branch
          %196 = sbr.rel (%p194) target = $region28
        $region27: #{tpu_custom_call.1} parent=23 // pred_region
          %s197 = sand.u32 %s93, 1
          %s198 = scalar_lea.sflag [#allocation9], %s197
          %s199 = sand.u32 %s93, 1
          %s200 = smul.addr %s199, 64
          %s201 = scalar_lea.vmem [#allocation8], %s200
          %s202 = smul.u32 %s28, 3
          %s203 = sadd.s32 %s202, %s29
          %p204 = scmp.lt.s32.totalorder %s203, 4
          %s205 = scalar_select %p204, %s203, 4
          %s207 = ssub.s32 1024, 1024
          %208 = vsyncadd %s198, %s207
          %s209 = smul.addr %s205, 64
          %s210 = scalar_lea.hbm %s2, %s209
          %s211 = sshll.u32 %s201, 4
          %s212 = int_to_ptr.vmem [resolvable:$true] %s211
          %217 = dma.hbm_to_vmem [thread:$0]  %s210, 1024, %s212, %s198, 320, 64, 4
        $region28: #{tpu_custom_call.1} parent=23 // pred_fallthru
          _
      $region24: #{tpu_custom_call.1} parent=5 // pred_fallthru
        _
      %p218 = scmp.le.s32.totalorder 1, %s21
      %p219 = scmp.lt.s32.totalorder %s21, 7
      %p220 = pnand %p218, %p219
      %p221 = pneg %p220
      // Predicated region
      $region29: #{tpu_custom_call.1} parent=5 // pred_check
        _
      $region30: #{tpu_custom_call.1} parent=5 // pred_check_branch
        %223 = sbr.rel (%p220) target = $region32
      $region31: #{tpu_custom_call.1} parent=5 // pred_region
        %s224 = ssub.s32 %s21, 1
        // Predicated region
        $region33: #{tpu_custom_call.1} parent=31 // pred_check
          %p225 = pneg %p54
        $region34: #{tpu_custom_call.1} parent=31 // pred_check_branch
          %227 = sbr.rel (%p225) target = $region36
        $region35: #{tpu_custom_call.1} parent=31 // pred_region
          %228 = dma.done [#allocation6], 32
        $region36: #{tpu_custom_call.1} parent=31 // pred_fallthru
          _
        %s229 = sand.u32 %s96, 1
        %s230 = scalar_lea.sflag [#allocation9], %s229
        %s231 = sand.u32 %s96, 1
        %s232 = smul.addr %s231, 64
        %s233 = scalar_lea.vmem [#allocation8], %s232
        // Predicated region
        $region37: #{tpu_custom_call.1} parent=31 // pred_check
          %p234 = pneg %p109
        $region38: #{tpu_custom_call.1} parent=31 // pred_check_branch
          %236 = sbr.rel (%p234) target = $region40
        $region39: #{tpu_custom_call.1} parent=31 // pred_region
          %237 = dma.done %s230, 1024
        $region40: #{tpu_custom_call.1} parent=31 // pred_fallthru
          _
        %p238 = pneg %p54
        %p239 = pneg %p51
        %p240 = pneg %p75
        %p241 = pneg %p72
        %s242 = sand.u32 %s96, 1
        %s243 = scalar_lea.sflag [#allocation9], %s242
        %s244 = sand.u32 %s96, 1
        %s245 = smul.addr %s244, 64
        %s246 = scalar_lea.vmem [#allocation8], %s245
        %p247 = pneg %p109
        %p248 = pneg %p106
        %p249 = pneg %p135
        %p250 = pneg %p132
        %s251 = sand.u32 %s122, 1
        %s252 = scalar_lea.sflag [#allocation7], %s251
        %s253 = sand.u32 %s122, 1
        %s254 = smul.addr %s253, 2
        %s255 = scalar_lea.vmem [#allocation10], %s254
        %p256 = pneg %p161
        %p257 = pneg %p158
        %s258 = sand.u32 %s148, 1
        %s259 = scalar_lea.sflag [#allocation12], %s258
        %s260 = sand.u32 %s148, 1
        %s261 = smul.addr %s260, 2
        %s262 = scalar_lea.vmem [#allocation11], %s261
        %s263 = smul.u32 %s30, 3
        %s264 = sadd.s32 %s263, %s31
        %p265 = scmp.lt.s32.totalorder %s264, 4
        %s266 = scalar_select %p265, %s264, 4
        %p268 = scmp.eq.s32.totalorder %s31, 0
        // Predicated region
        $region41: #{tpu_custom_call.1} parent=31 // pred_check
          %p269 = pneg %p268
        $region42: #{tpu_custom_call.1} parent=31 // pred_check_branch
          %271 = sbr.rel (%p269) target = $region44
        $region43: #{tpu_custom_call.1} parent=31 // pred_region
          %v272 = vld [vmem:[#allocation5] sm:$0x3]
          %v273 = vld [vmem:[%s1] sm:$0x1]
          %v274 = vmul.f32 %v272, %v272
          %vm275 = vcmask 1041408
          %v276 = vsel %vm275, %v274, 0.0
          %277 = vadd.xlane.f32.xlu0 %v276
          %v278 = vpop.xlane.xlu0 %277
          %v279 = vrcp.pop 128.0
          %v280 = vmul.f32 %v278, %v279
          %v281 = vadd.f32 %v280, 1e-06
          %v282 = vrsqrt.pop %v281
          %v283 = vmul.f32 %v272, %v282
          %v285 = vlaneseq
          %v286 = vshrl.u32 %v285, 7
          %v287 = vsub.s32 0, %v286
          %v288 = vrot.slane %v273, %v287
          %v290 = vmul.f32 %v283, %v288
          %v291 = vpack.c.bf16 %v290, %v290
          %292 = vst [vmem:[#allocation2] sm:$0x1] %v291
          %vm293 = vcmask 1024
          %294 = vst.msk [vmem:[#allocation3] sm:$0x3] %vm293, -inf
          %295 = vst.msk [vmem:[#allocation4] sm:$0x3] %vm293, 0
        $region44: #{tpu_custom_call.1} parent=31 // pred_fallthru
          _
        %v296 = vld [vmem:[#allocation2] sm:$0x1]
        %v297 = vld [vmem:[%s233] sm:$0xf]
        %v298 = vld [vmem:[%s233 + $0x4] sm:$0xf]
        %v299 = vld [vmem:[%s233 + $0x8] sm:$0xf]
        %v300 = vld [vmem:[%s233 + $0xc] sm:$0xf]
        %v301 = vld [vmem:[%s233 + $0x10] sm:$0xf]
        %v302 = vld [vmem:[%s233 + $0x14] sm:$0xf]
        %v303 = vld [vmem:[%s233 + $0x18] sm:$0xf]
        %v304 = vld [vmem:[%s233 + $0x1c] sm:$0xf]
        %v305 = vld [vmem:[%s233 + $0x20] sm:$0xf]
        %v306 = vld [vmem:[%s233 + $0x24] sm:$0xf]
        %v307 = vld [vmem:[%s233 + $0x28] sm:$0xf]
        %v308 = vld [vmem:[%s233 + $0x2c] sm:$0xf]
        %v309 = vld [vmem:[%s233 + $0x30] sm:$0xf]
        %v310 = vld [vmem:[%s233 + $0x34] sm:$0xf]
        %v311 = vld [vmem:[%s233 + $0x38] sm:$0xf]
        %v312 = vld [vmem:[%s233 + $0x3c] sm:$0xf]
        %v329 = vunpack.c.l.b16 %v297
        %v330 = vunpack.c.l.b16 %v298
        %v331 = vunpack.c.l.b16 %v299
        %v332 = vunpack.c.l.b16 %v300
        %v333 = vunpack.c.l.b16 %v301
        %v334 = vunpack.c.l.b16 %v302
        %v335 = vunpack.c.l.b16 %v303
        %v336 = vunpack.c.l.b16 %v304
        %v337 = vunpack.c.l.b16 %v305
        %v338 = vunpack.c.l.b16 %v306
        %v339 = vunpack.c.l.b16 %v307
        %v340 = vunpack.c.l.b16 %v308
        %v341 = vunpack.c.l.b16 %v309
        %v342 = vunpack.c.l.b16 %v310
        %v343 = vunpack.c.l.b16 %v311
        %v344 = vunpack.c.l.b16 %v312
        %v345 = vpack.c.b16 %v330, %v329
        %v346 = vpack.c.b16 %v332, %v331
        %v347 = vpack.c.b16 %v334, %v333
        %v348 = vpack.c.b16 %v336, %v335
        %v349 = vpack.c.b16 %v338, %v337
        %v350 = vpack.c.b16 %v340, %v339
        %v351 = vpack.c.b16 %v342, %v341
        %v352 = vpack.c.b16 %v344, %v343
        %361 = vmatprep.subr.bf16.mxu0 0
        %362 = vmatpush1.bf16.msra.mxu0 %v352
        %363 = vmatprep.subr.bf16.mxu0 0
        %364 = vmatpush1.bf16.msra.mxu0 %v351
        %365 = vmatprep.subr.bf16.mxu0 0
        %366 = vmatpush1.bf16.msra.mxu0 %v350
        %367 = vmatprep.subr.bf16.mxu0 0
        %368 = vmatpush1.bf16.msra.mxu0 %v349
        %369 = vmatprep.subr.bf16.mxu0 0
        %370 = vmatpush1.bf16.msra.mxu0 %v348
        %371 = vmatprep.subr.bf16.mxu0 0
        %372 = vmatpush1.bf16.msra.mxu0 %v347
        %373 = vmatprep.subr.bf16.mxu0 0
        %374 = vmatpush1.bf16.msra.mxu0 %v346
        %375 = vmatprep.subr.bf16.mxu0 0
        %376 = vmatpush1.bf16.msra.mxu0 %v345
        %377 = vmatprep.subr.bf16.mxu0 0
        %378 = vmatpush2.bf16.msra.mxu0 0
        %379 = vmatprep.subr.bf16.mxu0 0
        %380 = vmatpush2.bf16.msra.mxu0 0
        %381 = vmatprep.subr.bf16.mxu0 0
        %382 = vmatpush2.bf16.msra.mxu0 0
        %383 = vmatprep.subr.bf16.mxu0 0
        %384 = vmatpush2.bf16.msra.mxu0 0
        %385 = vmatprep.subr.bf16.mxu0 0
        %386 = vmatpush2.bf16.msra.mxu0 0
        %387 = vmatprep.subr.bf16.mxu0 0
        %388 = vmatpush2.bf16.msra.mxu0 0
        %389 = vmatprep.subr.bf16.mxu0 0
        %390 = vmatpush2.bf16.msra.mxu0 0
        %391 = vmatprep.subr.bf16.mxu0 0
        %392 = vmatpush2.bf16.msra.mxu0 0
        %393 = vmatprep.mubr.bf16.mxu0 0
        %394 = vmatmul.mubr.bf16.gmra.mxu0 %v296
        %v395 = vpop.f32.mrf.mxu0
        %v396 = vadd.f32 0.0, %v395
        %v397 = vpop.f32.mrf.mxu0
        %v398 = vpop.f32.mrf.mxu0
        %v399 = vpop.f32.mrf.mxu0
        %400 = vdwg.mxu0
        %s401 = smul.u32 %s30, 3
        %s402 = sadd.s32 %s401, %s31
        %p403 = scmp.lt.s32.totalorder %s402, 4
        %s404 = scalar_select %p403, %s402, 4
        %v405 = vlaneseq
        %v406 = vand.u32 %v405, 127
        %s407 = smul.u32 %s404, 128
        %v408 = vstv %s407
        %v409 = vadd.s32 %v406, %v408
        %vm410 = vcmp.lt.s32.totalorder %v409, 640
        %v411 = vsel %vm410, %v396, -inf
        %vm412 = vcmask 1041408
        %v413 = vsel %vm412, %v411, -inf
        %414 = vmax.xlane.f32.xlu0 %v413
        %v415 = vpop.xlane.xlu0 %414
        %vm416 = vcmp.eq.f32.partialorder %v411, %v415
        %v417 = vsel %vm416, %v409, 2147483647
        %v418 = vsel %vm412, %v417, 2147483647
        %v419 = vand.u32 %v418, 65535
        %v420 = vshra.s32 %v418, 16
        %v421 = vcvt.s32.f32 %v419
        %v422 = vcvt.s32.f32 %v420
        %423 = vmin.xlane.f32.xlu0 %v422
        %v424 = vpop.xlane.xlu0 %423
        %vm425 = vcmp.eq.f32.partialorder %v422, %v424
        %v426 = vsel %vm425, %v421, inf
        %427 = vmin.xlane.f32.xlu0 %v426
        %v428 = vpop.xlane.xlu0 %427
        %v429 = vcvt.f32.s32 %v428
        %v430 = vcvt.f32.s32 %v424
        %v431 = vshll.u32 %v430, 16
        %v432 = vadd.s32 %v431, %v429
        %v433 = vld [vmem:[#allocation3] sm:$0x3]
        %vm434 = vcmp.gt.f32.partialorder %v415, %v433
        %v435 = vld [vmem:[#allocation4] sm:$0x3]
        %v436 = vsel %vm434, %v432, %v435
        %vm437 = vcmask 1024
        %438 = vst.msk [vmem:[#allocation4] sm:$0x3] %vm437, %v436
        %v439 = vld [vmem:[#allocation3] sm:$0x3]
        %v440 = vsel %vm434, %v415, %v439
        %441 = vst.msk [vmem:[#allocation3] sm:$0x3] %vm437, %v440
        %p442 = scmp.eq.s32.totalorder %s31, 2
        // Predicated region
        $region45: #{tpu_custom_call.1} parent=31 // pred_check
          %p443 = pneg %p442
        $region46: #{tpu_custom_call.1} parent=31 // pred_check_branch
          %445 = sbr.rel (%p443) target = $region48
        $region47: #{tpu_custom_call.1} parent=31 // pred_region
          %v446 = vld [vmem:[#allocation3] sm:$0x3]
          %448 = vset.pattern.permute.xlu0 0
          %449 = vperm.xlu0 %448, %v446
          %v450 = vpop.permute.xlu0 %449
          %452 = vst [vmem:[%s255] sm:$0x3] %v450
          %v453 = vld [vmem:[#allocation4] sm:$0x3]
          %454 = vset.pattern.permute.xlu0 0
          %455 = vperm.xlu0 %454, %v453
          %v456 = vpop.permute.xlu0 %455
          %457 = vst [vmem:[%s262] sm:$0x3] %v456
        $region48: #{tpu_custom_call.1} parent=31 // pred_fallthru
          _
        %s458 = sand.u32 %s122, 1
        %s459 = scalar_lea.sflag [#allocation7], %s458
        %s460 = sand.u32 %s122, 1
        %s461 = smul.addr %s460, 2
        %s462 = scalar_lea.vmem [#allocation10], %s461
        %s463 = sand.u32 %s148, 1
        %s464 = scalar_lea.sflag [#allocation12], %s463
        %s465 = sand.u32 %s148, 1
        %s466 = smul.addr %s465, 2
        %s467 = scalar_lea.vmem [#allocation11], %s466
        // Predicated region
        $region49: #{tpu_custom_call.1} parent=31 // pred_check
          %p468 = pneg %p132
        $region50: #{tpu_custom_call.1} parent=31 // pred_check_branch
          %470 = sbr.rel (%p468) target = $region52
        $region51: #{tpu_custom_call.1} parent=31 // pred_region
          %s472 = ssub.s32 32, 32
          %473 = vsyncadd %s459, %s472
          %s474 = smul.addr %s30, 32
          %s475 = scalar_lea.hbm %s3, %s474
          %s477 = sshll.u32 %s462, 4
          %s478 = int_to_ptr.vmem [resolvable:$true] %s477
          %480 = dma.vmem_to_hbm [thread:$0]  %s478, 32, %s475, %s459
        $region52: #{tpu_custom_call.1} parent=31 // pred_fallthru
          _
        // Predicated region
        $region53: #{tpu_custom_call.1} parent=31 // pred_check
          %p481 = pneg %p158
        $region54: #{tpu_custom_call.1} parent=31 // pred_check_branch
          %483 = sbr.rel (%p481) target = $region56
        $region55: #{tpu_custom_call.1} parent=31 // pred_region
          %s485 = ssub.s32 32, 32
          %486 = vsyncadd %s464, %s485
          %s487 = smul.addr %s30, 32
          %s488 = scalar_lea.hbm %s4, %s487
          %s490 = sshll.u32 %s467, 4
          %s491 = int_to_ptr.vmem [resolvable:$true] %s490
          %493 = dma.vmem_to_hbm [thread:$0]  %s491, 32, %s488, %s464
        $region56: #{tpu_custom_call.1} parent=31 // pred_fallthru
          _
      $region32: #{tpu_custom_call.1} parent=5 // pred_fallthru
        _
      %p494 = scmp.le.s32.totalorder 2, %s21
      // Predicated region
      $region57: #{tpu_custom_call.1} parent=5 // pred_check
        %p495 = pneg %p494
      $region58: #{tpu_custom_call.1} parent=5 // pred_check_branch
        %497 = sbr.rel (%p495) target = $region60
      $region59: #{tpu_custom_call.1} parent=5 // pred_region
        %s498 = ssub.s32 %s21, 2
        // Predicated region
        $region61: #{tpu_custom_call.1} parent=59 // pred_check
          %p499 = pneg %p138
        $region62: #{tpu_custom_call.1} parent=59 // pred_check_branch
          %501 = sbr.rel (%p499) target = $region64
        $region63: #{tpu_custom_call.1} parent=59 // pred_region
          %s502 = sand.u32 %s123, 1
          %s503 = scalar_lea.sflag [#allocation7], %s502
          %s504 = sand.u32 %s123, 1
          %s505 = smul.addr %s504, 2
          %s506 = scalar_lea.vmem [#allocation10], %s505
          %507 = dma.done %s503, 32
        $region64: #{tpu_custom_call.1} parent=59 // pred_fallthru
          _
        // Predicated region
        $region65: #{tpu_custom_call.1} parent=59 // pred_check
          %p508 = pneg %p164
        $region66: #{tpu_custom_call.1} parent=59 // pred_check_branch
          %510 = sbr.rel (%p508) target = $region68
        $region67: #{tpu_custom_call.1} parent=59 // pred_region
          %s511 = sand.u32 %s149, 1
          %s512 = scalar_lea.sflag [#allocation12], %s511
          %s513 = sand.u32 %s149, 1
          %s514 = smul.addr %s513, 2
          %s515 = scalar_lea.vmem [#allocation11], %s514
          %516 = dma.done %s512, 32
        $region68: #{tpu_custom_call.1} parent=59 // pred_fallthru
          _
      $region60: #{tpu_custom_call.1} parent=5 // pred_fallthru
        _
    $region6: #{tpu_custom_call.1} parent=1 // loop_footer
      %s25 = sadd.s32 1, %s21
    $region7: #{tpu_custom_call.1} parent=1 // loop_footer_branch
      %20 = sbr.rel target = $region3
    $region8: #{tpu_custom_call.1} parent=1 // loop_exit
      _
    %517 = vsyncpa [#allocation6], 1
    %s518 = scalar_lea.sflag [#allocation6], 1
    %519 = vsyncpa %s518, 1
    %520 = vsyncpa [#allocation9], 1
    %s521 = scalar_lea.sflag [#allocation9], 1
    %522 = vsyncpa %s521, 1
    %523 = vsyncpa [#allocation7], 1
    %s524 = scalar_lea.sflag [#allocation7], 1
    %525 = vsyncpa %s524, 1
    %526 = vsyncpa [#allocation12], 1
    %s527 = scalar_lea.sflag [#allocation12], 1
    %528 = vsyncpa %s527, 1

</llo_original>
